<compile_context>
chip_gen: v7x
topology: tpu7x:2x2x1
jax: 0.10.0
libtpu: 0.0.40
codegen_flags: <defaults>
</compile_context>

<pallas_src>
import functools

import jax
import jax.numpy as jnp
from jax.experimental import pallas as pl
from jax.experimental.pallas import tpu as pltpu


# ----------------------------------------------------------------------------
# Kernel 1: fused 5-backbone feature extractor.
#   grid = (image, hw_tile); per step: stem matmul (all 5 models concatenated
#   on the channel axis) -> folded-BN affine -> swish -> block-diagonal head
#   matmul -> affine -> swish -> pool-sum accumulate; last hw_tile writes the
#   pooled features for this image.
# ----------------------------------------------------------------------------
def _backbone_kernel(x_ref, w0_ref, s0_ref, b0_ref, w1_ref, s1_ref, b1_ref,
                     o_ref, acc_ref, *, inv_hw):
    # Grid ids read once at top level (never inside pl.when bodies).
    t = pl.program_id(1)
    t_last = pl.num_programs(1) - 1

    @pl.when(t == 0)
    def _init():
        acc_ref[...] = jnp.zeros_like(acc_ref)

    x = x_ref[0]                                            # (hw_tile, K) bf16
    # stem conv (im2col matmul, 5 models concatenated) + folded BN + swish
    stem = jnp.dot(x, w0_ref[...], preferred_element_type=jnp.float32)
    stem = stem * s0_ref[...] + b0_ref[...]
    stem = stem * jax.nn.sigmoid(stem)
    # head 1x1 conv (block-diagonal => per-model) + folded BN + swish
    feats = jnp.dot(stem.astype(jnp.bfloat16), w1_ref[...],
                    preferred_element_type=jnp.float32)
    feats = feats * s1_ref[...] + b1_ref[...]
    feats = feats * jax.nn.sigmoid(feats)
    # global average pool: accumulate the per-tile sum (f32)
    acc_ref[...] += jnp.sum(feats, axis=0, keepdims=True)    # (1, 5*c_head)

    @pl.when(t == t_last)
    def _finalize():
        o_ref[0] = (acc_ref[...] * inv_hw).astype(o_ref.dtype)


def ensemble_backbones(params, patches, hw_tile):
    """patches: (N, HW, K) bf16  ->  pooled features (N, 1, 5*c_head) f32."""
    N, HW, K = patches.shape
    c_all_stem = params["w_stem_cat"].shape[1]
    c_all_head = params["w_head_bd"].shape[1]
    T = HW // hw_tile
    inv_hw = 1.0 / float(HW)

    kern = functools.partial(_backbone_kernel, inv_hw=inv_hw)
    return pl.pallas_call(
        kern,
        out_shape=jax.ShapeDtypeStruct((N, 1, c_all_head), jnp.float32),
        grid=(N, T),
        in_specs=[
            pl.BlockSpec((1, hw_tile, K), lambda n, t: (n, t, 0)),        # patches
            pl.BlockSpec((K, c_all_stem), lambda n, t: (0, 0)),           # stem W (cat)
            pl.BlockSpec((1, c_all_stem), lambda n, t: (0, 0)),           # bn0 scale
            pl.BlockSpec((1, c_all_stem), lambda n, t: (0, 0)),           # bn0 bias
            pl.BlockSpec((c_all_stem, c_all_head), lambda n, t: (0, 0)),  # head W (blkdiag)
            pl.BlockSpec((1, c_all_head), lambda n, t: (0, 0)),           # bn1 scale
            pl.BlockSpec((1, c_all_head), lambda n, t: (0, 0)),           # bn1 bias
        ],
        out_specs=pl.BlockSpec((1, 1, c_all_head), lambda n, t: (n, 0, 0)),
        scratch_shapes=[pltpu.VMEM((1, c_all_head), jnp.float32)],        # pool acc
        compiler_params=pltpu.CompilerParams(
            # image axis parallel (balanced megacore sharding on v7x),
            # HW axis is the pooled reduction -> arbitrary.
            dimension_semantics=("parallel", "arbitrary"),
            vmem_limit_bytes=32 * 1024 * 1024,
        ),
    )(patches,
      params["w_stem_cat"], params["bn0_scale"], params["bn0_bias"],
      params["w_head_bd"], params["bn1_scale"], params["bn1_bias"])


# ----------------------------------------------------------------------------
# Kernel 2: batched per-model fc1 -> fc2 (block-diagonal weights), then
#   cat(x1..x5, dim=2) -> Linear(5,1) -> squeeze(2) -> softmax(dim=1)
# ----------------------------------------------------------------------------
def _head_kernel(p_ref, wf1_ref, bf1_ref, wf2_ref, bf2_ref, wc_ref, bc_ref,
                 o_ref):
    pooled = p_ref[...]                                      # (N, 5*c_head)
    h = jnp.dot(pooled, wf1_ref[...],
                preferred_element_type=jnp.float32) + bf1_ref[...]
    # TODO(synk): nn.Dropout(0.5) in the backbone heads is identity at inference.
    logits = jnp.dot(h, wf2_ref[...],
                     preferred_element_type=jnp.float32) + bf2_ref[...]   # (N, 5*C)
    # ensemble classifier Linear(5,1) applied per class, + bias
    fused = jnp.dot(logits, wc_ref[...],
                    preferred_element_type=jnp.float32) + bc_ref[...]     # (N, C)
    # softmax over the class dim (dim=1)
    m = jnp.max(fused, axis=1, keepdims=True)
    e = jnp.exp(fused - m)
    o_ref[...] = (e / jnp.sum(e, axis=1, keepdims=True)).astype(o_ref.dtype)


def ensemble_head(params, pooled):
    N = pooled.shape[0]
    n_cls = params["w_comb"].shape[1]
    return pl.pallas_call(
        _head_kernel,
        out_shape=jax.ShapeDtypeStruct((N, n_cls), jnp.float32),
    )(pooled, params["w_fc1_bd"], params["b_fc1"],
      params["w_fc2_bd"], params["b_fc2"],
      params["w_comb"], params["b_cls"])


# ----------------------------------------------------------------------------
# Plain-JAX glue: im2col (3x3, stride 2, pad 1), tiling, parameter building
# ----------------------------------------------------------------------------
def im2col_3x3_s2(x_nchw):
    """3x3 conv, stride 2, pad 1 -> (N, Ho*Wo, 9*Cin). Assumes even H and W."""
    n, c, h, w = x_nchw.shape
    ho, wo = h // 2, w // 2
    x = jnp.transpose(x_nchw, (0, 2, 3, 1))                  # NHWC
    x = jnp.pad(x, ((0, 0), (1, 1), (1, 1), (0, 0)))
    cols = []
    for ki in range(3):
        for kj in range(3):
            cols.append(x[:, ki:ki + 2 * ho:2, kj:kj + 2 * wo:2, :])
    pat = jnp.concatenate(cols, axis=-1)                     # (N, Ho, Wo, 9*Cin)
    return pat.reshape(n, ho * wo, 9 * c), (n, ho, wo)


def _pick_hw_tile(hw, max_tile=4096):
    """Largest divisor of HW <= max_tile, preferring multiples of 128."""
    if hw <= max_tile:
        return hw
    best8 = None
    for t in range(max_tile, 7, -1):
        if hw % t == 0:
            if t % 128 == 0:
                return t
            if best8 is None and t % 8 == 0:
                best8 = t
    return best8 if best8 is not None else hw


def _block_diag(ws):
    """(M, a, b) per-model weights -> (M*a, M*b) block-diagonal matrix."""
    m, a, b = ws.shape
    eye = jnp.eye(m, dtype=ws.dtype)
    return jnp.einsum("mab,mn->manb", ws, eye).reshape(m * a, m * b)


def make_params(key, n_models=5, c_in=3, c_stem=32, c_head=64, fc_hidden=128,
                num_classes=2):
    ks = jax.random.split(key, 6)
    w_stem = jax.random.normal(ks[0], (n_models, 9 * c_in, c_stem), jnp.float32) * 0.1
    w_head = jax.random.normal(ks[1], (n_models, c_stem, c_head), jnp.float32) * 0.1
    w_fc1 = jax.random.normal(ks[2], (n_models, c_head, fc_hidden), jnp.float32) * 0.2
    w_fc2 = jax.random.normal(ks[3], (n_models, fc_hidden, num_classes), jnp.float32) * 0.05
    w_cls = jax.random.normal(ks[4], (n_models,), jnp.float32) * 0.3
    b_cls = jax.random.normal(ks[5], ()) * 0.1

    p = {}
    # --- backbone kernel params: model axis folded into channels ---
    p["w_stem_cat"] = jnp.transpose(w_stem, (1, 0, 2)).reshape(
        9 * c_in, n_models * c_stem).astype(jnp.bfloat16)          # (K, 5*c_stem)
    p["bn0_scale"] = jnp.ones((1, n_models * c_stem), jnp.float32)  # folded BN
    p["bn0_bias"] = jnp.zeros((1, n_models * c_stem), jnp.float32)
    p["w_head_bd"] = _block_diag(w_head).astype(jnp.bfloat16)       # (160, 320)
    p["bn1_scale"] = jnp.ones((1, n_models * c_head), jnp.float32)
    p["bn1_bias"] = jnp.zeros((1, n_models * c_head), jnp.float32)
    # --- head kernel params (block-diagonal => per-model fc layers) ---
    p["w_fc1_bd"] = _block_diag(w_fc1)                              # (320, 640)
    p["b_fc1"] = jnp.zeros((1, n_models * fc_hidden), jnp.float32)
    p["w_fc2_bd"] = _block_diag(w_fc2)                              # (640, 10)
    p["b_fc2"] = jnp.zeros((1, n_models * num_classes), jnp.float32)
    # ensemble classifier nn.Linear(5, 1): per-class combination matrix
    p["w_comb"] = jnp.einsum("m,cd->mcd", w_cls,
                             jnp.eye(num_classes, dtype=jnp.float32)
                             ).reshape(n_models * num_classes, num_classes)
    p["b_cls"] = jnp.full((1, num_classes), b_cls, jnp.float32)
    return p


def my_ensemble_forward(params, x_nchw, max_hw_tile=4096):
    # x1..x5 = modelX(x.clone())  -- one fused pallas_call for all 5 backbones
    patches, (n, ho, wo) = im2col_3x3_s2(x_nchw)
    patches = patches.astype(jnp.bfloat16)                   # bf16 MXU inputs
    hw_tile = _pick_hw_tile(ho * wo, max_hw_tile)
    pooled = ensemble_backbones(params, patches, hw_tile)    # (N, 1, 5*c_head)
    pooled = pooled[:, 0, :]                                 # (N, 5*c_head)
    # fc1 -> fc2 per model, cat -> Linear(5,1) -> squeeze -> softmax(dim=1)
    return ensemble_head(params, pooled)                     # (N, num_classes)


# ----------------------------------------------------------------------------
# Pure-JAX reference (same simplified backbones) for a correctness self-check.
# ----------------------------------------------------------------------------
def reference_forward(params, x_nchw):
    patches, (n, ho, wo) = im2col_3x3_s2(x_nchw)
    patches = patches.astype(jnp.bfloat16).astype(jnp.float32)
    stem = patches @ params["w_stem_cat"].astype(jnp.float32)
    stem = stem * params["bn0_scale"] + params["bn0_bias"]
    stem = stem * jax.nn.sigmoid(stem)
    feats = stem.astype(jnp.bfloat16).astype(jnp.float32) @ params[
        "w_head_bd"].astype(jnp.float32)
    feats = feats * params["bn1_scale"] + params["bn1_bias"]
    feats = feats * jax.nn.sigmoid(feats)
    pooled = jnp.mean(feats, axis=1)                         # (N, 5*c_head)
    h = pooled @ params["w_fc1_bd"] + params["b_fc1"]
    logits = h @ params["w_fc2_bd"] + params["b_fc2"]
    fused = logits @ params["w_comb"] + params["b_cls"]
    return jax.nn.softmax(fused, axis=1)


if __name__ == "__main__":
    key = jax.random.PRNGKey(0)
    k_x, k_p = jax.random.split(key)

    # Small NCHW image batch consistent with the PyTorch module's input.
    x = jax.random.normal(k_x, (2, 3, 16, 16), jnp.float32)
    params = make_params(k_p)

    out = jax.block_until_ready(my_ensemble_forward(params, x))
    ref = jax.block_until_ready(reference_forward(params, x))

    assert out.shape == (2, 2) and out.dtype == jnp.float32
    assert bool(jnp.all(jnp.isfinite(out)))
    # softmax rows must sum to 1 and match the pure-JAX reference
    assert jnp.allclose(jnp.sum(out, axis=1), 1.0, atol=1e-3)
    assert jnp.allclose(out, ref, atol=2e-2, rtol=2e-2)
    print("KERNEL_OK")
</pallas_src>

<mosaic_0001>
module attributes {stable_mosaic.version = 11 : i64} {
  func.func @_backbone_kernel(%arg0: i32, %arg1: i32, %arg2: memref<1x64x27xbf16, #tpu.memory_space<vmem>>, %arg3: memref<27x160xbf16, #tpu.memory_space<vmem>>, %arg4: memref<1x160xf32, #tpu.memory_space<vmem>>, %arg5: memref<1x160xf32, #tpu.memory_space<vmem>>, %arg6: memref<160x320xbf16, #tpu.memory_space<vmem>>, %arg7: memref<1x320xf32, #tpu.memory_space<vmem>>, %arg8: memref<1x320xf32, #tpu.memory_space<vmem>>, %arg9: memref<1x1x320xf32, #tpu.memory_space<vmem>>, %arg10: memref<1x320xf32, #tpu.memory_space<vmem>>) attributes {dimension_semantics = [#tpu.dimension_semantics<parallel>, #tpu.dimension_semantics<arbitrary>], iteration_bounds = array<i64: 2, 1>, scalar_prefetch = 0 : i64, scratch_operands = 1 : i64, tpu.core_type = #tpu.core_type<tc>, window_params = [{transform_indices = @transform_0, window_bounds = array<i64: 1, 64, 27>}, {pipeline_mode = #tpu.pipeline_mode<synchronous>, transform_indices = @transform_1, window_bounds = array<i64: 27, 160>}, {pipeline_mode = #tpu.pipeline_mode<synchronous>, transform_indices = @transform_2, window_bounds = array<i64: 1, 160>}, {pipeline_mode = #tpu.pipeline_mode<synchronous>, transform_indices = @transform_3, window_bounds = array<i64: 1, 160>}, {pipeline_mode = #tpu.pipeline_mode<synchronous>, transform_indices = @transform_4, window_bounds = array<i64: 160, 320>}, {pipeline_mode = #tpu.pipeline_mode<synchronous>, transform_indices = @transform_5, window_bounds = array<i64: 1, 320>}, {pipeline_mode = #tpu.pipeline_mode<synchronous>, transform_indices = @transform_6, window_bounds = array<i64: 1, 320>}, {transform_indices = @transform_7, window_bounds = array<i64: 1, 1, 320>}]} {
    %c0_i32 = arith.constant 0 : i32
    %0 = arith.cmpi eq, %arg1, %c0_i32 : i32
    %1 = arith.extui %0 : i1 to i32
    %c0_i32_0 = arith.constant 0 : i32
    %2 = arith.cmpi ne, %1, %c0_i32_0 : i32
    scf.if %2 {
      %cst_25 = arith.constant 0.000000e+00 : f32
      %42 = vector.broadcast %cst_25 : f32 to vector<1x320xf32>
      %c0_26 = arith.constant 0 : index
      %c0_27 = arith.constant 0 : index
      %43 = vector.load %arg10[%c0_26, %c0_27] : memref<1x320xf32, #tpu.memory_space<vmem>>, vector<1x320xf32>
      tpu.vector_store %arg10[%c0_26, %c0_27], %42 {strides = array<i32>} : memref<1x320xf32, #tpu.memory_space<vmem>>, vector<1x320xf32>,
    } else {
    }
    %c0 = arith.constant 0 : index
    %c0_1 = arith.constant 0 : index
    %c0_2 = arith.constant 0 : index
    %3 = vector.load %arg2[%c0, %c0_1, %c0_2] : memref<1x64x27xbf16, #tpu.memory_space<vmem>>, vector<1x64x27xbf16>
    %4 = vector.shape_cast %3 : vector<1x64x27xbf16> to vector<64x27xbf16>
    %c0_3 = arith.constant 0 : index
    %c0_4 = arith.constant 0 : index
    %5 = vector.load %arg3[%c0_3, %c0_4] : memref<27x160xbf16, #tpu.memory_space<vmem>>, vector<27x160xbf16>
    %cst = arith.constant dense<0.000000e+00> : vector<64x160xf32>
    %6 = tpu.matmul %4, %5, %cst {dimension_numbers = #tpu.dot_dimension_numbers<[1], [0], [0], [1], [0, 0, 1, 1], [], []>} : vector<64x27xbf16>, vector<27x160xbf16>, vector<64x160xf32> -> vector<64x160xf32>
    %c0_5 = arith.constant 0 : index
    %c0_6 = arith.constant 0 : index
    %7 = vector.load %arg4[%c0_5, %c0_6] : memref<1x160xf32, #tpu.memory_space<vmem>>, vector<1x160xf32>
    %8 = vector.broadcast %7 : vector<1x160xf32> to vector<64x160xf32>
    %9 = arith.mulf %6, %8 : vector<64x160xf32>
    %c0_7 = arith.constant 0 : index
    %c0_8 = arith.constant 0 : index
    %10 = vector.load %arg5[%c0_7, %c0_8] : memref<1x160xf32, #tpu.memory_space<vmem>>, vector<1x160xf32>
    %11 = vector.broadcast %10 : vector<1x160xf32> to vector<64x160xf32>
    %12 = arith.addf %9, %11 : vector<64x160xf32>
    %13 = arith.negf %12 : vector<64x160xf32>
    %14 = math.exp %13 : vector<64x160xf32>
    %cst_9 = arith.constant 1.000000e+00 : f32
    %15 = vector.broadcast %cst_9 : f32 to vector<64x160xf32>
    %16 = arith.addf %15, %14 : vector<64x160xf32>
    %17 = arith.divf %15, %16 : vector<64x160xf32>
    %18 = arith.mulf %12, %17 : vector<64x160xf32>
    %19 = arith.truncf %18 : vector<64x160xf32> to vector<64x160xbf16>
    %c0_10 = arith.constant 0 : index
    %c0_11 = arith.constant 0 : index
    %20 = vector.load %arg6[%c0_10, %c0_11] : memref<160x320xbf16, #tpu.memory_space<vmem>>, vector<160x320xbf16>
    %cst_12 = arith.constant dense<0.000000e+00> : vector<64x320xf32>
    %21 = tpu.matmul %19, %20, %cst_12 {dimension_numbers = #tpu.dot_dimension_numbers<[1], [0], [0], [1], [0, 0, 1, 1], [], []>} : vector<64x160xbf16>, vector<160x320xbf16>, vector<64x320xf32> -> vector<64x320xf32>
    %c0_13 = arith.constant 0 : index
    %c0_14 = arith.constant 0 : index
    %22 = vector.load %arg7[%c0_13, %c0_14] : memref<1x320xf32, #tpu.memory_space<vmem>>, vector<1x320xf32>
    %23 = vector.broadcast %22 : vector<1x320xf32> to vector<64x320xf32>
    %24 = arith.mulf %21, %23 : vector<64x320xf32>
    %c0_15 = arith.constant 0 : index
    %c0_16 = arith.constant 0 : index
    %25 = vector.load %arg8[%c0_15, %c0_16] : memref<1x320xf32, #tpu.memory_space<vmem>>, vector<1x320xf32>
    %26 = vector.broadcast %25 : vector<1x320xf32> to vector<64x320xf32>
    %27 = arith.addf %24, %26 : vector<64x320xf32>
    %28 = arith.negf %27 : vector<64x320xf32>
    %29 = math.exp %28 : vector<64x320xf32>
    %cst_17 = arith.constant 1.000000e+00 : f32
    %30 = vector.broadcast %cst_17 : f32 to vector<64x320xf32>
    %31 = arith.addf %30, %29 : vector<64x320xf32>
    %32 = arith.divf %30, %31 : vector<64x320xf32>
    %33 = arith.mulf %27, %32 : vector<64x320xf32>
    %c0_18 = arith.constant 0 : index
    %c0_19 = arith.constant 0 : index
    %34 = vector.load %arg10[%c0_18, %c0_19] : memref<1x320xf32, #tpu.memory_space<vmem>>, vector<1x320xf32>
    %cst_20 = arith.constant dense<0.000000e+00> : vector<320xf32>
    %35 = vector.multi_reduction <add>, %33, %cst_20 [0] : vector<64x320xf32> to vector<320xf32>
    %36 = vector.shape_cast %35 : vector<320xf32> to vector<1x320xf32>
    %37 = arith.addf %34, %36 : vector<1x320xf32>
    %c0_21 = arith.constant 0 : index
    %c0_22 = arith.constant 0 : index
    %38 = vector.load %arg10[%c0_21, %c0_22] : memref<1x320xf32, #tpu.memory_space<vmem>>, vector<1x320xf32>
    tpu.vector_store %arg10[%c0_21, %c0_22], %37 {strides = array<i32>} : memref<1x320xf32, #tpu.memory_space<vmem>>, vector<1x320xf32>,
    %c0_i32_23 = arith.constant 0 : i32
    %39 = arith.cmpi eq, %arg1, %c0_i32_23 : i32
    %40 = arith.extui %39 : i1 to i32
    %c0_i32_24 = arith.constant 0 : i32
    %41 = arith.cmpi ne, %40, %c0_i32_24 : i32
    scf.if %41 {
      %c0_25 = arith.constant 0 : index
      %c0_26 = arith.constant 0 : index
      %42 = vector.load %arg10[%c0_25, %c0_26] : memref<1x320xf32, #tpu.memory_space<vmem>>, vector<1x320xf32>
      %cst_27 = arith.constant 1.562500e-02 : f32
      %43 = vector.broadcast %cst_27 : f32 to vector<1x320xf32>
      %44 = arith.mulf %42, %43 : vector<1x320xf32>
      %c0_28 = arith.constant 0 : index
      %c0_29 = arith.constant 0 : index
      %c0_30 = arith.constant 0 : index
      %45 = vector.load %arg9[%c0_28, %c0_29, %c0_30] : memref<1x1x320xf32, #tpu.memory_space<vmem>>, vector<1x1x320xf32>
      %46 = vector.shape_cast %45 : vector<1x1x320xf32> to vector<1x320xf32>
      %47 = vector.shape_cast %44 : vector<1x320xf32> to vector<1x1x320xf32>
      tpu.vector_store %arg9[%c0_28, %c0_29, %c0_30], %47 {strides = array<i32>} : memref<1x1x320xf32, #tpu.memory_space<vmem>>, vector<1x1x320xf32>,
    } else {
    }
    return
  }
  func.func @transform_0(%arg0: i32, %arg1: i32) -> (i32, i32, i32) {
    %c0_i32 = arith.constant 0 : i32
    %c0_i32_0 = arith.constant 0 : i32
    return %arg0, %arg1, %c0_i32 : i32, i32, i32
  }
  func.func @transform_1(%arg0: i32, %arg1: i32) -> (i32, i32) {
    %c0_i32 = arith.constant 0 : i32
    %c0_i32_0 = arith.constant 0 : i32
    %c0_i32_1 = arith.constant 0 : i32
    return %c0_i32, %c0_i32_0 : i32, i32
  }
  func.func @transform_2(%arg0: i32, %arg1: i32) -> (i32, i32) {
    %c0_i32 = arith.constant 0 : i32
    %c0_i32_0 = arith.constant 0 : i32
    %c0_i32_1 = arith.constant 0 : i32
    return %c0_i32, %c0_i32_0 : i32, i32
  }
  func.func @transform_3(%arg0: i32, %arg1: i32) -> (i32, i32) {
    %c0_i32 = arith.constant 0 : i32
    %c0_i32_0 = arith.constant 0 : i32
    %c0_i32_1 = arith.constant 0 : i32
    return %c0_i32, %c0_i32_0 : i32, i32
  }
  func.func @transform_4(%arg0: i32, %arg1: i32) -> (i32, i32) {
    %c0_i32 = arith.constant 0 : i32
    %c0_i32_0 = arith.constant 0 : i32
    %c0_i32_1 = arith.constant 0 : i32
    return %c0_i32, %c0_i32_0 : i32, i32
  }
  func.func @transform_5(%arg0: i32, %arg1: i32) -> (i32, i32) {
    %c0_i32 = arith.constant 0 : i32
    %c0_i32_0 = arith.constant 0 : i32
    %c0_i32_1 = arith.constant 0 : i32
    return %c0_i32, %c0_i32_0 : i32, i32
  }
  func.func @transform_6(%arg0: i32, %arg1: i32) -> (i32, i32) {
    %c0_i32 = arith.constant 0 : i32
    %c0_i32_0 = arith.constant 0 : i32
    %c0_i32_1 = arith.constant 0 : i32
    return %c0_i32, %c0_i32_0 : i32, i32
  }
  func.func @transform_7(%arg0: i32, %arg1: i32) -> (i32, i32, i32) {
    %c0_i32 = arith.constant 0 : i32
    %c0_i32_0 = arith.constant 0 : i32
    %c0_i32_1 = arith.constant 0 : i32
    return %arg0, %c0_i32, %c0_i32_0 : i32, i32, i32
  }
}

</mosaic_0001>

<llo_original>
// kernel: tpu_custom_call.1
$region0: #{tpu_custom_call.1}
  #allocation0 [shape = 'u32[]', space=smem, size = 0x4, offset = 0x4, fixed_abs, tag = 'smem constant byte address 0x4 - core index']
  #allocation1 [shape = 'u32[144,128]{1,0:T(1,128)}', space=vmem, size = 0x12000, scoped, tag = 'internal scratch']
  #allocation2 [shape = 'f32[1,320]{1,0:T(1,128)}', space=vmem, size = 0x600, scoped, tag = 'scratch operand']
  %s0 = inlined_call_operand.vmem [shape: bf16[2,64,27], index: 0, kind: input, shape index: {}]
  %s1 = inlined_call_operand.vmem [shape: bf16[27,160], index: 1, kind: input, shape index: {}]
  %s2 = inlined_call_operand.vmem [shape: f32[1,160], index: 2, kind: input, shape index: {}]
  %s3 = inlined_call_operand.vmem [shape: f32[1,160], index: 3, kind: input, shape index: {}]
  %s4 = inlined_call_operand.hbm [shape: bf16[160,320], index: 4, kind: input, shape index: {}]
  %s5 = inlined_call_operand.vmem [shape: f32[1,320], index: 5, kind: input, shape index: {}]
  %s6 = inlined_call_operand.vmem [shape: f32[1,320], index: 6, kind: input, shape index: {}]
  %s7 = inlined_call_operand.hbm [shape: f32[2,1,320], index: 7, kind: output, shape index: {}]
  %s8 = sld [smem:[#allocation0]]
  $region73: #{tpu_custom_call.1} parent=0
    _
  %s10 = ssub.s32 1, %s8
  %s11 = scalar_select 0, %s10, %s8
  $region1: #{tpu_custom_call.1} parent=0
    #allocation3 [shape = 'u8[122880]{0}', space=vmem, size = 0x1e000, scoped, tag = 'input window, operand 4, single buffered']
    #allocation4 [shape = 's32[2]{0}', space=sflag, size = 0x8, scoped, tag = 'scoped memory for tpu_custom_call.1']
    #allocation5 [shape = 's32[2]{0}', space=sflag, size = 0x8, scoped, tag = 'scoped memory for tpu_custom_call.1']
    #allocation6 [shape = 'u8[3072]{0}', space=vmem, size = 0xc00, scoped, tag = 'output window, operand 0']
    %12 = vsyncpa [#allocation4], 0
    %13 = vsyncpa [#allocation5], 0
    %s14 = scalar_lea.sflag [#allocation5], 1
    %15 = vsyncpa %s14, 0
    loop: start=0, step=1, limit=4
    $region2: #{tpu_custom_call.1} parent=1 // loop_pre_header
      _
    $region3: #{tpu_custom_call.1} parent=1 // loop_header
      %s17 = sphi 0, %s21
      %p18 = scmp.ge.s32.totalorder %s17, 4
      %s24 = sphi 0, %s36
      %s25 = sphi 0, %s32
      %s26 = sphi 0, %s24
      %s27 = sphi 0, %s25
      %s28 = sphi 0, %s26
      %s29 = sphi 0, %s27
      %s41 = sphi 0, %s43
      %s44 = sphi 0, %s41
      %s45 = sphi 0, %s44
      %s61 = sphi 0, %s45
      %s65 = sphi 0, %s65
      %s67 = sphi 0, %s65
      %s68 = sphi 0, %s67
      %s82 = sphi 0, %s68
      %s86 = sphi 0, %s86
      %s88 = sphi 0, %s86
      %s89 = sphi 0, %s88
      %s103 = sphi 0, %s89
      %s107 = sphi 0, %s107
      %s109 = sphi 0, %s107
      %s110 = sphi 0, %s109
      %s124 = sphi 0, %s110
      %s128 = sphi 0, %s128
      %s130 = sphi 0, %s128
      %s131 = sphi 0, %s130
      %s145 = sphi 0, %s131
      %s149 = sphi 0, %s149
      %s151 = sphi 0, %s149
      %s152 = sphi 0, %s151
      %s166 = sphi 0, %s152
      %s170 = sphi 0, %s170
      %s172 = sphi 0, %s170
      %s173 = sphi 0, %s172
      %s187 = sphi 0, %s173
      %s193 = sphi 0, %s195
      %s196 = sphi 0, %s193
      %s197 = sphi 0, %s196
      %s213 = sphi 0, %s197
    $region4: #{tpu_custom_call.1} parent=1 // loop_header_branch
      %20 = sbr.rel (%p18) target = $region8
    $region5: #{tpu_custom_call.1} parent=1 // loop_body
      %s22 = ssub.s32 %s17, 1
      %s23 = ssub.s32 %s17, 2
      %s30 = sadd.s32 1, %s25
      %p31 = scmp.ge.s32.totalorder %s30, 1
      %s32 = scalar_select %p31, 0, %s30
      %s33 = sadd.s32 1, %s24
      %s34 = scalar_select %p31, %s33, %s24
      %p35 = scmp.ge.s32.totalorder %s34, 2
      %s36 = scalar_select %p35, 0, %s34
      %s37 = ssub.s32 %s24, %s36
      %s38 = ssub.s32 %s25, %s32
      %s39 = sor.u32 %s37, %s38
      %p40 = scmp.eq.s32.totalorder %s39, 0
      %s42 = sadd.s32 %s41, 1
      %s43 = scalar_select %p40, %s41, %s42
      %p46 = pneg %p40
      %p47 = scmp.eq.s32.totalorder %s17, 1
      %p48 = por %p46, %p47
      %p49 = scmp.ne.s32.totalorder %s41, %s44
      %p50 = scmp.eq.s32.totalorder %s17, 0
      %p51 = por %p49, %p50
      %p52 = scmp.ne.s32.totalorder %s41, %s44
      %p53 = scmp.eq.s32.totalorder %s22, 1
      %p54 = por %p52, %p53
      %p55 = scmp.ne.s32.totalorder %s44, %s45
      %p56 = scmp.eq.s32.totalorder %s22, 0
      %p57 = por %p55, %p56
      %p58 = scmp.ne.s32.totalorder %s44, %s45
      %p59 = scmp.eq.s32.totalorder %s23, 1
      %p60 = por %p58, %p59
      %p62 = scmp.ne.s32.totalorder %s45, %s61
      %p63 = scmp.eq.s32.totalorder %s23, 0
      %p64 = por %p62, %p63
      %s66 = sadd.s32 %s65, 1
      %p69 = scmp.eq.s32.totalorder %s17, 1
      %p70 = scmp.ne.s32.totalorder %s65, %s67
      %p71 = scmp.eq.s32.totalorder %s17, 0
      %p72 = por %p70, %p71
      %p73 = scmp.ne.s32.totalorder %s65, %s67
      %p74 = scmp.eq.s32.totalorder %s22, 1
      %p75 = por %p73, %p74
      %p76 = scmp.ne.s32.totalorder %s67, %s68
      %p77 = scmp.eq.s32.totalorder %s22, 0
      %p78 = por %p76, %p77
      %p79 = scmp.ne.s32.totalorder %s67, %s68
      %p80 = scmp.eq.s32.totalorder %s23, 1
      %p81 = por %p79, %p80
      %p83 = scmp.ne.s32.totalorder %s68, %s82
      %p84 = scmp.eq.s32.totalorder %s23, 0
      %p85 = por %p83, %p84
      %s87 = sadd.s32 %s86, 1
      %p90 = scmp.eq.s32.totalorder %s17, 1
      %p91 = scmp.ne.s32.totalorder %s86, %s88
      %p92 = scmp.eq.s32.totalorder %s17, 0
      %p93 = por %p91, %p92
      %p94 = scmp.ne.s32.totalorder %s86, %s88
      %p95 = scmp.eq.s32.totalorder %s22, 1
      %p96 = por %p94, %p95
      %p97 = scmp.ne.s32.totalorder %s88, %s89
      %p98 = scmp.eq.s32.totalorder %s22, 0
      %p99 = por %p97, %p98
      %p100 = scmp.ne.s32.totalorder %s88, %s89
      %p101 = scmp.eq.s32.totalorder %s23, 1
      %p102 = por %p100, %p101
      %p104 = scmp.ne.s32.totalorder %s89, %s103
      %p105 = scmp.eq.s32.totalorder %s23, 0
      %p106 = por %p104, %p105
      %s108 = sadd.s32 %s107, 1
      %p111 = scmp.eq.s32.totalorder %s17, 1
      %p112 = scmp.ne.s32.totalorder %s107, %s109
      %p113 = scmp.eq.s32.totalorder %s17, 0
      %p114 = por %p112, %p113
      %p115 = scmp.ne.s32.totalorder %s107, %s109
      %p116 = scmp.eq.s32.totalorder %s22, 1
      %p117 = por %p115, %p116
      %p118 = scmp.ne.s32.totalorder %s109, %s110
      %p119 = scmp.eq.s32.totalorder %s22, 0
      %p120 = por %p118, %p119
      %p121 = scmp.ne.s32.totalorder %s109, %s110
      %p122 = scmp.eq.s32.totalorder %s23, 1
      %p123 = por %p121, %p122
      %p125 = scmp.ne.s32.totalorder %s110, %s124
      %p126 = scmp.eq.s32.totalorder %s23, 0
      %p127 = por %p125, %p126
      %s129 = sadd.s32 %s128, 1
      %p132 = scmp.eq.s32.totalorder %s17, 1
      %p133 = scmp.ne.s32.totalorder %s128, %s130
      %p134 = scmp.eq.s32.totalorder %s17, 0
      %p135 = por %p133, %p134
      %p136 = scmp.ne.s32.totalorder %s128, %s130
      %p137 = scmp.eq.s32.totalorder %s22, 1
      %p138 = por %p136, %p137
      %p139 = scmp.ne.s32.totalorder %s130, %s131
      %p140 = scmp.eq.s32.totalorder %s22, 0
      %p141 = por %p139, %p140
      %p142 = scmp.ne.s32.totalorder %s130, %s131
      %p143 = scmp.eq.s32.totalorder %s23, 1
      %p144 = por %p142, %p143
      %p146 = scmp.ne.s32.totalorder %s131, %s145
      %p147 = scmp.eq.s32.totalorder %s23, 0
      %p148 = por %p146, %p147
      %s150 = sadd.s32 %s149, 1
      %p153 = scmp.eq.s32.totalorder %s17, 1
      %p154 = scmp.ne.s32.totalorder %s149, %s151
      %p155 = scmp.eq.s32.totalorder %s17, 0
      %p156 = por %p154, %p155
      %p157 = scmp.ne.s32.totalorder %s149, %s151
      %p158 = scmp.eq.s32.totalorder %s22, 1
      %p159 = por %p157, %p158
      %p160 = scmp.ne.s32.totalorder %s151, %s152
      %p161 = scmp.eq.s32.totalorder %s22, 0
      %p162 = por %p160, %p161
      %p163 = scmp.ne.s32.totalorder %s151, %s152
      %p164 = scmp.eq.s32.totalorder %s23, 1
      %p165 = por %p163, %p164
      %p167 = scmp.ne.s32.totalorder %s152, %s166
      %p168 = scmp.eq.s32.totalorder %s23, 0
      %p169 = por %p167, %p168
      %s171 = sadd.s32 %s170, 1
      %p174 = scmp.eq.s32.totalorder %s17, 1
      %p175 = scmp.ne.s32.totalorder %s170, %s172
      %p176 = scmp.eq.s32.totalorder %s17, 0
      %p177 = por %p175, %p176
      %p178 = scmp.ne.s32.totalorder %s170, %s172
      %p179 = scmp.eq.s32.totalorder %s22, 1
      %p180 = por %p178, %p179
      %p181 = scmp.ne.s32.totalorder %s172, %s173
      %p182 = scmp.eq.s32.totalorder %s22, 0
      %p183 = por %p181, %p182
      %p184 = scmp.ne.s32.totalorder %s172, %s173
      %p185 = scmp.eq.s32.totalorder %s23, 1
      %p186 = por %p184, %p185
      %p188 = scmp.ne.s32.totalorder %s173, %s187
      %p189 = scmp.eq.s32.totalorder %s23, 0
      %p190 = por %p188, %p189
      %s191 = ssub.s32 %s24, %s36
      %p192 = scmp.eq.s32.totalorder %s191, 0
      %s194 = sadd.s32 %s193, 1
      %s195 = scalar_select %p192, %s193, %s194
      %p198 = pneg %p192
      %p199 = scmp.eq.s32.totalorder %s17, 1
      %p200 = por %p198, %p199
      %p201 = scmp.ne.s32.totalorder %s193, %s196
      %p202 = scmp.eq.s32.totalorder %s17, 0
      %p203 = por %p201, %p202
      %p204 = scmp.ne.s32.totalorder %s193, %s196
      %p205 = scmp.eq.s32.totalorder %s22, 1
      %p206 = por %p204, %p205
      %p207 = scmp.ne.s32.totalorder %s196, %s197
      %p208 = scmp.eq.s32.totalorder %s22, 0
      %p209 = por %p207, %p208
      %p210 = scmp.ne.s32.totalorder %s196, %s197
      %p211 = scmp.eq.s32.totalorder %s23, 1
      %p212 = por %p210, %p211
      %p214 = scmp.ne.s32.totalorder %s197, %s213
      %p215 = scmp.eq.s32.totalorder %s23, 0
      %p216 = por %p214, %p215
      %p217 = scmp.le.s32.totalorder 1, %s17
      %p218 = scmp.lt.s32.totalorder %s17, 3
      %p219 = pnand %p217, %p218
      %p220 = pneg %p219
      // Predicated region
      $region9: #{tpu_custom_call.1} parent=5 // pred_check
        _
      $region10: #{tpu_custom_call.1} parent=5 // pred_check_branch
        %222 = sbr.rel (%p219) target = $region12
      $region11: #{tpu_custom_call.1} parent=5 // pred_region
        %s223 = ssub.s32 %s17, 1
        // Predicated region
        $region13: #{tpu_custom_call.1} parent=11 // pred_check
          %p224 = pneg %p78
        $region14: #{tpu_custom_call.1} parent=11 // pred_check_branch
          %226 = sbr.rel (%p224) target = $region16
        $region15: #{tpu_custom_call.1} parent=11 // pred_region
          _
        $region16: #{tpu_custom_call.1} parent=11 // pred_fallthru
          _
        // Predicated region
        $region17: #{tpu_custom_call.1} parent=11 // pred_check
          %p227 = pneg %p99
        $region18: #{tpu_custom_call.1} parent=11 // pred_check_branch
          %229 = sbr.rel (%p227) target = $region20
        $region19: #{tpu_custom_call.1} parent=11 // pred_region
          _
        $region20: #{tpu_custom_call.1} parent=11 // pred_fallthru
          _
        // Predicated region
        $region21: #{tpu_custom_call.1} parent=11 // pred_check
          %p230 = pneg %p120
        $region22: #{tpu_custom_call.1} parent=11 // pred_check_branch
          %232 = sbr.rel (%p230) target = $region24
        $region23: #{tpu_custom_call.1} parent=11 // pred_region
          _
        $region24: #{tpu_custom_call.1} parent=11 // pred_fallthru
          _
        // Predicated region
        $region25: #{tpu_custom_call.1} parent=11 // pred_check
          %p233 = pneg %p141
        $region26: #{tpu_custom_call.1} parent=11 // pred_check_branch
          %235 = sbr.rel (%p233) target = $region28
        $region27: #{tpu_custom_call.1} parent=11 // pred_region
          %s237 = ssub.s32 3840, 3840
          %238 = vsyncadd [#allocation4], %s237
          %s239 = sshll.u32 [#allocation3], 4
          %s240 = int_to_ptr.vmem [resolvable:$true] %s239
          %245 = dma.hbm_to_vmem [thread:$0]  %s4, 3840, %s240, [#allocation4], 192, 192, 12
        $region28: #{tpu_custom_call.1} parent=11 // pred_fallthru
          _
        // Predicated region
        $region29: #{tpu_custom_call.1} parent=11 // pred_check
          %p246 = pneg %p162
        $region30: #{tpu_custom_call.1} parent=11 // pred_check_branch
          %248 = sbr.rel (%p246) target = $region32
        $region31: #{tpu_custom_call.1} parent=11 // pred_region
          _
        $region32: #{tpu_custom_call.1} parent=11 // pred_fallthru
          _
        // Predicated region
        $region33: #{tpu_custom_call.1} parent=11 // pred_check
          %p249 = pneg %p183
        $region34: #{tpu_custom_call.1} parent=11 // pred_check_branch
          %251 = sbr.rel (%p249) target = $region36
        $region35: #{tpu_custom_call.1} parent=11 // pred_region
          _
        $region36: #{tpu_custom_call.1} parent=11 // pred_fallthru
          _
      $region12: #{tpu_custom_call.1} parent=5 // pred_fallthru
        _
      %p252 = scmp.lt.s32.totalorder %s17, 2
      // Predicated region
      $region37: #{tpu_custom_call.1} parent=5 // pred_check
        %p253 = pneg %p252
      $region38: #{tpu_custom_call.1} parent=5 // pred_check_branch
        %255 = sbr.rel (%p253) target = $region40
      $region39: #{tpu_custom_call.1} parent=5 // pred_region
        // Predicated region
        $region41: #{tpu_custom_call.1} parent=39 // pred_check
          %p256 = pneg %p51
        $region42: #{tpu_custom_call.1} parent=39 // pred_check_branch
          %258 = sbr.rel (%p256) target = $region44
        $region43: #{tpu_custom_call.1} parent=39 // pred_region
          %s259 = smul.u32 8, %s25
          %p260 = scmp.lt.s32.totalorder %s24, 1
          %s261 = scalar_select %p260, %s24, 1
          %p262 = scmp.lt.s32.totalorder %s259, 7
          %s263 = scalar_select %p262, %s259, 7
          %s264 = smul.addr %s261, 8
          %s265 = sadd.s32 %s263, %s264
          %s266 = smul.addr %s265, 4
          %s267 = scalar_lea.vmem %s0, %s266
          %s268 = smul.u32 8, %s25
        $region44: #{tpu_custom_call.1} parent=39 // pred_fallthru
          _
      $region40: #{tpu_custom_call.1} parent=5 // pred_fallthru
        _
      %p269 = scmp.le.s32.totalorder 1, %s17
      %p270 = scmp.lt.s32.totalorder %s17, 3
      %p271 = pnand %p269, %p270
      %p272 = pneg %p271
      // Predicated region
      $region45: #{tpu_custom_call.1} parent=5 // pred_check
        _
      $region46: #{tpu_custom_call.1} parent=5 // pred_check_branch
        %274 = sbr.rel (%p271) target = $region48
      $region47: #{tpu_custom_call.1} parent=5 // pred_region
        %s275 = ssub.s32 %s17, 1
        // Predicated region
        $region49: #{tpu_custom_call.1} parent=47 // pred_check
          %p276 = pneg %p141
        $region50: #{tpu_custom_call.1} parent=47 // pred_check_branch
          %278 = sbr.rel (%p276) target = $region52
        $region51: #{tpu_custom_call.1} parent=47 // pred_region
          %279 = dma.done [#allocation4], 3840
        $region52: #{tpu_custom_call.1} parent=47 // pred_fallthru
          _
        %s280 = smul.u32 8, %s27
        %p281 = scmp.lt.s32.totalorder %s26, 1
        %s282 = scalar_select %p281, %s26, 1
        %p283 = scmp.lt.s32.totalorder %s280, 7
        %s284 = scalar_select %p283, %s280, 7
        %s285 = smul.addr %s282, 8
        %s286 = sadd.s32 %s284, %s285
        %s287 = smul.addr %s286, 4
        %s288 = scalar_lea.vmem %s0, %s287
        %p289 = pneg %p57
        %p290 = pneg %p54
        %p291 = pneg %p78
        %p292 = pneg %p75
        %p293 = pneg %p99
        %p294 = pneg %p96
        %p295 = pneg %p120
        %p296 = pneg %p117
        %p297 = pneg %p141
        %p298 = pneg %p138
        %p299 = pneg %p162
        %p300 = pneg %p159
        %p301 = pneg %p183
        %p302 = pneg %p180
        %p303 = pneg %p209
        %p304 = pneg %p206
        %s305 = sand.u32 %s196, 1
        %s306 = scalar_lea.sflag [#allocation5], %s305
        %s307 = sand.u32 %s196, 1
        %s308 = smul.addr %s307, 3
        %s309 = scalar_lea.vmem [#allocation6], %s308
        %s310 = smul.u32 8, %s27
        %p311 = scmp.lt.s32.totalorder %s26, 1
        %s312 = scalar_select %p311, %s26, 1
        %p313 = scmp.lt.s32.totalorder %s310, 7
        %s314 = scalar_select %p313, %s310, 7
        %s315 = smul.addr %s312, 8
        %s316 = sadd.s32 %s314, %s315
        %s317 = smul.addr %s316, 4
        %s318 = scalar_lea.vmem %s0, %s317
        %s319 = smul.u32 8, %s27
        %p321 = scmp.eq.s32.totalorder %s27, 0
        // Predicated region
        $region53: #{tpu_custom_call.1} parent=47 // pred_check
          %p322 = pneg %p321
        $region54: #{tpu_custom_call.1} parent=47 // pred_check_branch
          %324 = sbr.rel (%p322) target = $region56
        $region55: #{tpu_custom_call.1} parent=47 // pred_region
          %v325 = vlaneseq
          %vm326 = vcmp.ge.s32.totalorder %v325, 0
          %vm327 = vcmp.lt.s32.totalorder %v325, 320
          %vm328 = vmand %vm326, %vm327
          %329 = vst.msk [vmem:[#allocation2] sm:$0x7] %vm328, 0.0
        $region56: #{tpu_custom_call.1} parent=47 // pred_fallthru
          _
        %v330 = vld [vmem:[%s318] sm:$0xf]
        %v331 = vld [vmem:[%s318 + $0x4] sm:$0xf]
        %v332 = vld [vmem:[%s318 + $0x8] sm:$0xf]
        %v333 = vld [vmem:[%s318 + $0xc] sm:$0xf]
        %v334 = vld [vmem:[%s318 + $0x10] sm:$0xf]
        %v335 = vld [vmem:[%s318 + $0x14] sm:$0xf]
        %v336 = vld [vmem:[%s318 + $0x18] sm:$0xf]
        %v337 = vld [vmem:[%s318 + $0x1c] sm:$0xf]
        %v338 = vld [vmem:[%s1] sm:$0xff]
        %v339 = vld [vmem:[%s1 + $0x8] sm:$0xff]
        %v340 = vld [vmem:[%s1 + $0x10] sm:$0xff]
        %v341 = vld [vmem:[%s1 + $0x18] sm:$0x33]
        %v350 = vunpack.c.l.b16 %v330
        %v351 = vunpack.c.l.b16 %v331
        %v352 = vunpack.c.l.b16 %v332
        %v353 = vunpack.c.l.b16 %v333
        %v354 = vunpack.c.l.b16 %v334
        %v355 = vunpack.c.l.b16 %v335
        %v356 = vunpack.c.l.b16 %v336
        %v357 = vunpack.c.l.b16 %v337
        %v358 = vpack.c.b16 %v351, %v350
        %v359 = vpack.c.b16 %v353, %v352
        %v360 = vpack.c.b16 %v355, %v354
        %v361 = vpack.c.b16 %v357, %v356
        %v366 = vunpack.c.l.b16 %v338
        %v367 = vunpack.c.h.b16 %v338
        %v368 = vunpack.c.l.b16 %v339
        %v369 = vunpack.c.h.b16 %v339
        %v370 = vunpack.c.l.b16 %v340
        %v371 = vunpack.c.h.b16 %v340
        %v372 = vunpack.c.l.b16 %v341
        %v373 = vunpack.c.h.b16 %v341
        %v374 = vpack.c.b16 %v368, %v366
        %v375 = vpack.c.b16 %v369, %v367
        %v376 = vpack.c.b16 %v372, %v370
        %v377 = vpack.c.b16 %v373, %v371
        %vm380 = vcmask 220160
        %v382 = vsel %vm380, %v358, 0
        %v385 = vsel %vm380, %v359, 0
        %v388 = vsel %vm380, %v360, 0
        %v391 = vsel %vm380, %v361, 0
        %vm393 = vcmask 1044480
        %vm394 = vcmask 1045504
        %v395 = vsel %vm393, 4294967295, 65535
        %v396 = vsel %vm394, %v395, 0
        %v398 = vand.u32 %v376, %v396
        %v401 = vand.u32 %v377, %v396
        %403 = vmatprep.subr.bf16.mxu0 %v375
        %404 = vmatpush1.bf16.msra.mxu0 %v374
        %405 = vmatprep.subr.bf16.mxu0 %v401
        %406 = vmatpush1.bf16.msra.mxu0 %v398
        %407 = vmatprep.subr.bf16.mxu0 0
        %408 = vmatpush1.bf16.msra.mxu0 0
        %409 = vmatprep.subr.bf16.mxu0 0
        %410 = vmatpush1.bf16.msra.mxu0 0
        %411 = vmatprep.subr.bf16.mxu0 0
        %412 = vmatpush1.bf16.msra.mxu0 0
        %413 = vmatprep.subr.bf16.mxu0 0
        %414 = vmatpush1.bf16.msra.mxu0 0
        %415 = vmatprep.subr.bf16.mxu0 0
        %416 = vmatpush1.bf16.msra.mxu0 0
        %417 = vmatprep.subr.bf16.mxu0 0
        %418 = vmatpush1.bf16.msra.mxu0 0
        %419 = vmatprep.subr.bf16.mxu0 0
        %420 = vmatpush1.bf16.msra.mxu0 0
        %421 = vmatprep.subr.bf16.mxu0 0
        %422 = vmatpush1.bf16.msra.mxu0 0
        %423 = vmatprep.subr.bf16.mxu0 0
        %424 = vmatpush1.bf16.msra.mxu0 0
        %425 = vmatprep.subr.bf16.mxu0 0
        %426 = vmatpush1.bf16.msra.mxu0 0
        %427 = vmatprep.subr.bf16.mxu0 0
        %428 = vmatpush1.bf16.msra.mxu0 0
        %429 = vmatprep.subr.bf16.mxu0 0
        %430 = vmatpush1.bf16.msra.mxu0 0
        %431 = vmatprep.subr.bf16.mxu0 0
        %432 = vmatpush1.bf16.msra.mxu0 0
        %433 = vmatprep.subr.bf16.mxu0 0
        %434 = vmatpush1.bf16.msra.mxu0 0
        %435 = vmatprep.mubr.bf16.mxu0 0
        %436 = vmatmul.mubr.bf16.gmra.mrb[0].mxu0 %v382
        %v437 = vpop.f32.mrb[0].mxu0
        %v438 = vadd.f32 0.0, %v437
        %v439 = vpop.f32.mrb[0].mxu0
        %v440 = vadd.f32 0.0, %v439
        %v441 = vpop.f32.mrb[0].mxu0
        %v442 = vadd.f32 0.0, %v441
        %v443 = vpop.f32.mrb[0].mxu0
        %v444 = vadd.f32 0.0, %v443
        %445 = vmatprep.mubr.bf16.mxu0 0
        %446 = vmatmul.mubr.bf16.gmra.mrb[0].mxu0 %v385
        %v447 = vpop.f32.mrb[0].mxu0
        %v448 = vadd.f32 0.0, %v447
        %v449 = vpop.f32.mrb[0].mxu0
        %v450 = vadd.f32 0.0, %v449
        %v451 = vpop.f32.mrb[0].mxu0
        %v452 = vadd.f32 0.0, %v451
        %v453 = vpop.f32.mrb[0].mxu0
        %v454 = vadd.f32 0.0, %v453
        %455 = vmatprep.mubr.bf16.mxu0 0
        %456 = vmatmul.mubr.bf16.gmra.mrb[0].mxu0 %v388
        %v457 = vpop.f32.mrb[0].mxu0
        %v458 = vadd.f32 0.0, %v457
        %v459 = vpop.f32.mrb[0].mxu0
        %v460 = vadd.f32 0.0, %v459
        %v461 = vpop.f32.mrb[0].mxu0
        %v462 = vadd.f32 0.0, %v461
        %v463 = vpop.f32.mrb[0].mxu0
        %v464 = vadd.f32 0.0, %v463
        %465 = vmatprep.mubr.bf16.mxu0 0
        %466 = vmatmul.mubr.bf16.gmra.mrb[0].mxu0 %v391
        %v467 = vpop.f32.mrb[0].mxu0
        %v468 = vadd.f32 0.0, %v467
        %v469 = vpop.f32.mrb[0].mxu0
        %v470 = vadd.f32 0.0, %v469
        %v471 = vpop.f32.mrb[0].mxu0
        %v472 = vadd.f32 0.0, %v471
        %v473 = vpop.f32.mrb[0].mxu0
        %v474 = vadd.f32 0.0, %v473
        %475 = vdwg.mxu0
        %v476 = vld [vmem:[%s2] sm:$0x3]
        %v478 = vlaneseq
        %v479 = vshrl.u32 %v478, 7
        %v480 = vsub.s32 0, %v479
        %v481 = vrot.slane %v476, %v480
        %v482 = vlaneseq
        %v483 = vshrl.u32 %v482, 7
        %v484 = vsub.s32 1, %v483
        %v485 = vrot.slane %v476, %v484
        %v488 = vmul.f32 %v438, %v481
        %v489 = vmul.f32 %v440, %v485
        %v490 = vmul.f32 %v442, %v481
        %v491 = vmul.f32 %v444, %v485
        %v492 = vmul.f32 %v448, %v481
        %v493 = vmul.f32 %v450, %v485
        %v494 = vmul.f32 %v452, %v481
        %v495 = vmul.f32 %v454, %v485
        %v496 = vmul.f32 %v458, %v481
        %v497 = vmul.f32 %v460, %v485
        %v498 = vmul.f32 %v462, %v481
        %v499 = vmul.f32 %v464, %v485
        %v500 = vmul.f32 %v468, %v481
        %v501 = vmul.f32 %v470, %v485
        %v502 = vmul.f32 %v472, %v481
        %v503 = vmul.f32 %v474, %v485
        %v504 = vld [vmem:[%s3] sm:$0x3]
        %v506 = vlaneseq
        %v507 = vshrl.u32 %v506, 7
        %v508 = vsub.s32 0, %v507
        %v509 = vrot.slane %v504, %v508
        %v510 = vlaneseq
        %v511 = vshrl.u32 %v510, 7
        %v512 = vsub.s32 1, %v511
        %v513 = vrot.slane %v504, %v512
        %v516 = vadd.f32 %v488, %v509
        %v517 = vadd.f32 %v489, %v513
        %v518 = vadd.f32 %v490, %v509
        %v519 = vadd.f32 %v491, %v513
        %v520 = vadd.f32 %v492, %v509
        %v521 = vadd.f32 %v493, %v513
        %v522 = vadd.f32 %v494, %v509
        %v523 = vadd.f32 %v495, %v513
        %v524 = vadd.f32 %v496, %v509
        %v525 = vadd.f32 %v497, %v513
        %v526 = vadd.f32 %v498, %v509
        %v527 = vadd.f32 %v499, %v513
        %v528 = vadd.f32 %v500, %v509
        %v529 = vadd.f32 %v501, %v513
        %v530 = vadd.f32 %v502, %v509
        %v531 = vadd.f32 %v503, %v513
        %v532 = vxor.u32 %v516, 2147483648
        %v533 = vxor.u32 %v517, 2147483648
        %v534 = vxor.u32 %v518, 2147483648
        %v535 = vxor.u32 %v519, 2147483648
        %v536 = vxor.u32 %v520, 2147483648
        %v537 = vxor.u32 %v521, 2147483648
        %v538 = vxor.u32 %v522, 2147483648
        %v539 = vxor.u32 %v523, 2147483648
        %v540 = vxor.u32 %v524, 2147483648
        %v541 = vxor.u32 %v525, 2147483648
        %v542 = vxor.u32 %v526, 2147483648
        %v543 = vxor.u32 %v527, 2147483648
        %v544 = vxor.u32 %v528, 2147483648
        %v545 = vxor.u32 %v529, 2147483648
        %v546 = vxor.u32 %v530, 2147483648
        %v547 = vxor.u32 %v531, 2147483648
        %v548 = vmul.f32 %v532, 1.442695
        %v549 = vpow.pop %v548
        %v550 = vmul.f32 %v533, 1.442695
        %v551 = vpow.pop %v550
        %v552 = vmul.f32 %v534, 1.442695
        %v553 = vpow.pop %v552
        %v554 = vmul.f32 %v535, 1.442695
        %v555 = vpow.pop %v554
        %v556 = vmul.f32 %v536, 1.442695
        %v557 = vpow.pop %v556
        %v558 = vmul.f32 %v537, 1.442695
        %v559 = vpow.pop %v558
        %v560 = vmul.f32 %v538, 1.442695
        %v561 = vpow.pop %v560
        %v562 = vmul.f32 %v539, 1.442695
        %v563 = vpow.pop %v562
        %v564 = vmul.f32 %v540, 1.442695
        %v565 = vpow.pop %v564
        %v566 = vmul.f32 %v541, 1.442695
        %v567 = vpow.pop %v566
        %v568 = vmul.f32 %v542, 1.442695
        %v569 = vpow.pop %v568
        %v570 = vmul.f32 %v543, 1.442695
        %v571 = vpow.pop %v570
        %v572 = vmul.f32 %v544, 1.442695
        %v573 = vpow.pop %v572
        %v574 = vmul.f32 %v545, 1.442695
        %v575 = vpow.pop %v574
        %v576 = vmul.f32 %v546, 1.442695
        %v577 = vpow.pop %v576
        %v578 = vmul.f32 %v547, 1.442695
        %v579 = vpow.pop %v578
        %v580 = vadd.f32 %v549, 1.0
        %v581 = vadd.f32 %v551, 1.0
        %v582 = vadd.f32 %v553, 1.0
        %v583 = vadd.f32 %v555, 1.0
        %v584 = vadd.f32 %v557, 1.0
        %v585 = vadd.f32 %v559, 1.0
        %v586 = vadd.f32 %v561, 1.0
        %v587 = vadd.f32 %v563, 1.0
        %v588 = vadd.f32 %v565, 1.0
        %v589 = vadd.f32 %v567, 1.0
        %v590 = vadd.f32 %v569, 1.0
        %v591 = vadd.f32 %v571, 1.0
        %v592 = vadd.f32 %v573, 1.0
        %v593 = vadd.f32 %v575, 1.0
        %v594 = vadd.f32 %v577, 1.0
        %v595 = vadd.f32 %v579, 1.0
        %v596 = vrcp.pop %v580
        %v597 = vmul.f32 1.0, %v596
        %v598 = vrcp.pop %v581
        %v599 = vmul.f32 1.0, %v598
        %v600 = vrcp.pop %v582
        %v601 = vmul.f32 1.0, %v600
        %v602 = vrcp.pop %v583
        %v603 = vmul.f32 1.0, %v602
        %v604 = vrcp.pop %v584
        %v605 = vmul.f32 1.0, %v604
        %v606 = vrcp.pop %v585
        %v607 = vmul.f32 1.0, %v606
        %v608 = vrcp.pop %v586
        %v609 = vmul.f32 1.0, %v608
        %v610 = vrcp.pop %v587
        %v611 = vmul.f32 1.0, %v610
        %v612 = vrcp.pop %v588
        %v613 = vmul.f32 1.0, %v612
        %v614 = vrcp.pop %v589
        %v615 = vmul.f32 1.0, %v614
        %v616 = vrcp.pop %v590
        %v617 = vmul.f32 1.0, %v616
        %v618 = vrcp.pop %v591
        %v619 = vmul.f32 1.0, %v618
        %v620 = vrcp.pop %v592
        %v621 = vmul.f32 1.0, %v620
        %v622 = vrcp.pop %v593
        %v623 = vmul.f32 1.0, %v622
        %v624 = vrcp.pop %v594
        %v625 = vmul.f32 1.0, %v624
        %v626 = vrcp.pop %v595
        %v627 = vmul.f32 1.0, %v626
        %v628 = vmul.f32 %v516, %v597
        %v629 = vmul.f32 %v517, %v599
        %v630 = vmul.f32 %v518, %v601
        %v631 = vmul.f32 %v519, %v603
        %v632 = vmul.f32 %v520, %v605
        %v633 = vmul.f32 %v521, %v607
        %v634 = vmul.f32 %v522, %v609
        %v635 = vmul.f32 %v523, %v611
        %v636 = vmul.f32 %v524, %v613
        %v637 = vmul.f32 %v525, %v615
        %v638 = vmul.f32 %v526, %v617
        %v639 = vmul.f32 %v527, %v619
        %v640 = vmul.f32 %v528, %v621
        %v641 = vmul.f32 %v529, %v623
        %v642 = vmul.f32 %v530, %v625
        %v643 = vmul.f32 %v531, %v627
        %v644 = vpack.c.bf16 %v630, %v628
        %v645 = vpack.c.bf16 %v631, %v629
        %v646 = vpack.c.bf16 %v634, %v632
        %v647 = vpack.c.bf16 %v635, %v633
        %v648 = vpack.c.bf16 %v638, %v636
        %v649 = vpack.c.bf16 %v639, %v637
        %v650 = vpack.c.bf16 %v642, %v640
        %v651 = vpack.c.bf16 %v643, %v641
        %v652 = vld [vmem:[#allocation3] sm:$0xff]
        %v653 = vld [vmem:[#allocation3 + $0x8] sm:$0xf]
        %v654 = vld [vmem:[#allocation3 + $0xc] sm:$0xff]
        %v655 = vld [vmem:[#allocation3 + $0x14] sm:$0xf]
        %v656 = vld [vmem:[#allocation3 + $0x18] sm:$0xff]
        %v657 = vld [vmem:[#allocation3 + $0x20] sm:$0xf]
        %v658 = vld [vmem:[#allocation3 + $0x24] sm:$0xff]
        %v659 = vld [vmem:[#allocation3 + $0x2c] sm:$0xf]
        %v660 = vld [vmem:[#allocation3 + $0x30] sm:$0xff]
        %v661 = vld [vmem:[#allocation3 + $0x38] sm:$0xf]
        %v662 = vld [vmem:[#allocation3 + $0x3c] sm:$0xff]
        %v663 = vld [vmem:[#allocation3 + $0x44] sm:$0xf]
        %v664 = vld [vmem:[#allocation3 + $0x48] sm:$0xff]
        %v665 = vld [vmem:[#allocation3 + $0x50] sm:$0xf]
        %v666 = vld [vmem:[#allocation3 + $0x54] sm:$0xff]
        %v667 = vld [vmem:[#allocation3 + $0x5c] sm:$0xf]
        %v668 = vld [vmem:[#allocation3 + $0x60] sm:$0xff]
        %v669 = vld [vmem:[#allocation3 + $0x68] sm:$0xf]
        %v670 = vld [vmem:[#allocation3 + $0x6c] sm:$0xff]
        %v671 = vld [vmem:[#allocation3 + $0x74] sm:$0xf]
        %v672 = vld [vmem:[#allocation3 + $0x78] sm:$0xff]
        %v673 = vld [vmem:[#allocation3 + $0x80] sm:$0xf]
        %v674 = vld [vmem:[#allocation3 + $0x84] sm:$0xff]
        %v675 = vld [vmem:[#allocation3 + $0x8c] sm:$0xf]
        %v676 = vld [vmem:[#allocation3 + $0x90] sm:$0xff]
        %v677 = vld [vmem:[#allocation3 + $0x98] sm:$0xf]
        %v678 = vld [vmem:[#allocation3 + $0x9c] sm:$0xff]
        %v679 = vld [vmem:[#allocation3 + $0xa4] sm:$0xf]
        %v680 = vld [vmem:[#allocation3 + $0xa8] sm:$0xff]
        %v681 = vld [vmem:[#allocation3 + $0xb0] sm:$0xf]
        %v682 = vld [vmem:[#allocation3 + $0xb4] sm:$0xff]
        %v683 = vld [vmem:[#allocation3 + $0xbc] sm:$0xf]
        %v684 = vld [vmem:[#allocation3 + $0xc0] sm:$0xff]
        %v685 = vld [vmem:[#allocation3 + $0xc8] sm:$0xf]
        %v686 = vld [vmem:[#allocation3 + $0xcc] sm:$0xff]
        %v687 = vld [vmem:[#allocation3 + $0xd4] sm:$0xf]
        %v688 = vld [vmem:[#allocation3 + $0xd8] sm:$0xff]
        %v689 = vld [vmem:[#allocation3 + $0xe0] sm:$0xf]
        %v690 = vld [vmem:[#allocation3 + $0xe4] sm:$0xff]
        %v691 = vld [vmem:[#allocation3 + $0xec] sm:$0xf]
        %v732 = vunpack.c.l.b16 %v652
        %v733 = vunpack.c.h.b16 %v652
        %v734 = vunpack.c.l.b16 %v653
        %v735 = vunpack.c.l.b16 %v654
        %v736 = vunpack.c.h.b16 %v654
        %v737 = vunpack.c.l.b16 %v655
        %v738 = vunpack.c.l.b16 %v656
        %v739 = vunpack.c.h.b16 %v656
        %v740 = vunpack.c.l.b16 %v657
        %v741 = vunpack.c.l.b16 %v658
        %v742 = vunpack.c.h.b16 %v658
        %v743 = vunpack.c.l.b16 %v659
        %v744 = vunpack.c.l.b16 %v660
        %v745 = vunpack.c.h.b16 %v660
        %v746 = vunpack.c.l.b16 %v661
        %v747 = vunpack.c.l.b16 %v662
        %v748 = vunpack.c.h.b16 %v662
        %v749 = vunpack.c.l.b16 %v663
        %v750 = vunpack.c.l.b16 %v664
        %v751 = vunpack.c.h.b16 %v664
        %v752 = vunpack.c.l.b16 %v665
        %v753 = vunpack.c.l.b16 %v666
        %v754 = vunpack.c.h.b16 %v666
        %v755 = vunpack.c.l.b16 %v667
        %v756 = vunpack.c.l.b16 %v668
        %v757 = vunpack.c.h.b16 %v668
        %v758 = vunpack.c.l.b16 %v669
        %v759 = vunpack.c.l.b16 %v670
        %v760 = vunpack.c.h.b16 %v670
        %v761 = vunpack.c.l.b16 %v671
        %v762 = vunpack.c.l.b16 %v672
        %v763 = vunpack.c.h.b16 %v672
        %v764 = vunpack.c.l.b16 %v673
        %v765 = vunpack.c.l.b16 %v674
        %v766 = vunpack.c.h.b16 %v674
        %v767 = vunpack.c.l.b16 %v675
        %v768 = vunpack.c.l.b16 %v676
        %v769 = vunpack.c.h.b16 %v676
        %v770 = vunpack.c.l.b16 %v677
        %v771 = vunpack.c.l.b16 %v678
        %v772 = vunpack.c.h.b16 %v678
        %v773 = vunpack.c.l.b16 %v679
        %v774 = vunpack.c.l.b16 %v680
        %v775 = vunpack.c.h.b16 %v680
        %v776 = vunpack.c.l.b16 %v681
        %v777 = vunpack.c.l.b16 %v682
        %v778 = vunpack.c.h.b16 %v682
        %v779 = vunpack.c.l.b16 %v683
        %v780 = vunpack.c.l.b16 %v684
        %v781 = vunpack.c.h.b16 %v684
        %v782 = vunpack.c.l.b16 %v685
        %v783 = vunpack.c.l.b16 %v686
        %v784 = vunpack.c.h.b16 %v686
        %v785 = vunpack.c.l.b16 %v687
        %v786 = vunpack.c.l.b16 %v688
        %v787 = vunpack.c.h.b16 %v688
        %v788 = vunpack.c.l.b16 %v689
        %v789 = vunpack.c.l.b16 %v690
        %v790 = vunpack.c.h.b16 %v690
        %v791 = vunpack.c.l.b16 %v691
        %v792 = vpack.c.b16 %v735, %v732
        %v793 = vpack.c.b16 %v736, %v733
        %v794 = vpack.c.b16 %v737, %v734
        %v795 = vpack.c.b16 %v741, %v738
        %v796 = vpack.c.b16 %v742, %v739
        %v797 = vpack.c.b16 %v743, %v740
        %v798 = vpack.c.b16 %v747, %v744
        %v799 = vpack.c.b16 %v748, %v745
        %v800 = vpack.c.b16 %v749, %v746
        %v801 = vpack.c.b16 %v753, %v750
        %v802 = vpack.c.b16 %v754, %v751
        %v803 = vpack.c.b16 %v755, %v752
        %v804 = vpack.c.b16 %v759, %v756
        %v805 = vpack.c.b16 %v760, %v757
        %v806 = vpack.c.b16 %v761, %v758
        %v807 = vpack.c.b16 %v765, %v762
        %v808 = vpack.c.b16 %v766, %v763
        %v809 = vpack.c.b16 %v767, %v764
        %v810 = vpack.c.b16 %v771, %v768
        %v811 = vpack.c.b16 %v772, %v769
        %v812 = vpack.c.b16 %v773, %v770
        %v813 = vpack.c.b16 %v777, %v774
        %v814 = vpack.c.b16 %v778, %v775
        %v815 = vpack.c.b16 %v779, %v776
        %v816 = vpack.c.b16 %v783, %v780
        %v817 = vpack.c.b16 %v784, %v781
        %v818 = vpack.c.b16 %v785, %v782
        %v819 = vpack.c.b16 %v789, %v786
        %v820 = vpack.c.b16 %v790, %v787
        %v821 = vpack.c.b16 %v791, %v788
        %vm852 = vcmask 261120
        %v854 = vsel %vm852, %v645, 0
        %v857 = vsel %vm852, %v647, 0
        %v860 = vsel %vm852, %v649, 0
        %v863 = vsel %vm852, %v651, 0
        %865 = vmatprep.subr.bf16.mxu0 %v793
        %866 = vmatpush1.bf16.msra.mxu0 %v792
        %867 = vmatprep.subr.bf16.mxu0 %v796
        %868 = vmatpush1.bf16.msra.mxu0 %v795
        %869 = vmatprep.subr.bf16.mxu0 %v799
        %870 = vmatpush1.bf16.msra.mxu0 %v798
        %871 = vmatprep.subr.bf16.mxu0 %v802
        %872 = vmatpush1.bf16.msra.mxu0 %v801
        %873 = vmatprep.subr.bf16.mxu0 %v805
        %874 = vmatpush1.bf16.msra.mxu0 %v804
        %875 = vmatprep.subr.bf16.mxu0 %v808
        %876 = vmatpush1.bf16.msra.mxu0 %v807
        %877 = vmatprep.subr.bf16.mxu0 %v811
        %878 = vmatpush1.bf16.msra.mxu0 %v810
        %879 = vmatprep.subr.bf16.mxu0 %v814
        %880 = vmatpush1.bf16.msra.mxu0 %v813
        %881 = vmatprep.subr.bf16.mxu0 %v817
        %882 = vmatpush1.bf16.msra.mxu0 %v816
        %883 = vmatprep.subr.bf16.mxu0 %v820
        %884 = vmatpush1.bf16.msra.mxu0 %v819
        %885 = vmatprep.subr.bf16.mxu0 0
        %886 = vmatpush1.bf16.msra.mxu0 0
        %887 = vmatprep.subr.bf16.mxu0 0
        %888 = vmatpush1.bf16.msra.mxu0 0
        %889 = vmatprep.subr.bf16.mxu0 0
        %890 = vmatpush1.bf16.msra.mxu0 0
        %891 = vmatprep.subr.bf16.mxu0 0
        %892 = vmatpush1.bf16.msra.mxu0 0
        %893 = vmatprep.subr.bf16.mxu0 0
        %894 = vmatpush1.bf16.msra.mxu0 0
        %895 = vmatprep.subr.bf16.mxu0 0
        %896 = vmatpush1.bf16.msra.mxu0 0
        %897 = vmatprep.mubr.bf16.mxu0 %v854
        %898 = vmatmul.mubr.bf16.gmra.mrb[0].mxu0 %v644
        %v899 = vpop.f32.mrb[0].mxu0
        %v900 = vadd.f32 0.0, %v899
        %v901 = vpop.f32.mrb[0].mxu0
        %v902 = vadd.f32 0.0, %v901
        %v903 = vpop.f32.mrb[0].mxu0
        %v904 = vadd.f32 0.0, %v903
        %v905 = vpop.f32.mrb[0].mxu0
        %v906 = vadd.f32 0.0, %v905
        %907 = vmatprep.mubr.bf16.mxu0 %v857
        %908 = vmatmul.mubr.bf16.gmra.mrb[0].mxu0 %v646
        %v909 = vpop.f32.mrb[0].mxu0
        %v910 = vadd.f32 0.0, %v909
        %v911 = vpop.f32.mrb[0].mxu0
        %v912 = vadd.f32 0.0, %v911
        %v913 = vpop.f32.mrb[0].mxu0
        %v914 = vadd.f32 0.0, %v913
        %v915 = vpop.f32.mrb[0].mxu0
        %v916 = vadd.f32 0.0, %v915
        %917 = vmatprep.mubr.bf16.mxu0 %v860
        %918 = vmatmul.mubr.bf16.gmra.mrb[0].mxu0 %v648
        %v919 = vpop.f32.mrb[0].mxu0
        %v920 = vadd.f32 0.0, %v919
        %v921 = vpop.f32.mrb[0].mxu0
        %v922 = vadd.f32 0.0, %v921
        %v923 = vpop.f32.mrb[0].mxu0
        %v924 = vadd.f32 0.0, %v923
        %v925 = vpop.f32.mrb[0].mxu0
        %v926 = vadd.f32 0.0, %v925
        %927 = vmatprep.mubr.bf16.mxu0 %v863
        %928 = vmatmul.mubr.bf16.gmra.mrb[0].mxu0 %v650
        %v929 = vpop.f32.mrb[0].mxu0
        %v930 = vadd.f32 0.0, %v929
        %v931 = vpop.f32.mrb[0].mxu0
        %v932 = vadd.f32 0.0, %v931
        %v933 = vpop.f32.mrb[0].mxu0
        %v934 = vadd.f32 0.0, %v933
        %v935 = vpop.f32.mrb[0].mxu0
        %v936 = vadd.f32 0.0, %v935
        %937 = vdwg.mxu0
        %938 = vmatprep.subr.bf16.mxu0 0
        %939 = vmatpush1.bf16.msra.mxu0 %v794
        %940 = vmatprep.subr.bf16.mxu0 0
        %941 = vmatpush1.bf16.msra.mxu0 %v797
        %942 = vmatprep.subr.bf16.mxu0 0
        %943 = vmatpush1.bf16.msra.mxu0 %v800
        %944 = vmatprep.subr.bf16.mxu0 0
        %945 = vmatpush1.bf16.msra.mxu0 %v803
        %946 = vmatprep.subr.bf16.mxu0 0
        %947 = vmatpush1.bf16.msra.mxu0 %v806
        %948 = vmatprep.subr.bf16.mxu0 0
        %949 = vmatpush1.bf16.msra.mxu0 %v809
        %950 = vmatprep.subr.bf16.mxu0 0
        %951 = vmatpush1.bf16.msra.mxu0 %v812
        %952 = vmatprep.subr.bf16.mxu0 0
        %953 = vmatpush1.bf16.msra.mxu0 %v815
        %954 = vmatprep.subr.bf16.mxu0 0
        %955 = vmatpush1.bf16.msra.mxu0 %v818
        %956 = vmatprep.subr.bf16.mxu0 0
        %957 = vmatpush1.bf16.msra.mxu0 %v821
        %958 = vmatprep.subr.bf16.mxu0 0
        %959 = vmatpush1.bf16.msra.mxu0 0
        %960 = vmatprep.subr.bf16.mxu0 0
        %961 = vmatpush1.bf16.msra.mxu0 0
        %962 = vmatprep.subr.bf16.mxu0 0
        %963 = vmatpush1.bf16.msra.mxu0 0
        %964 = vmatprep.subr.bf16.mxu0 0
        %965 = vmatpush1.bf16.msra.mxu0 0
        %966 = vmatprep.subr.bf16.mxu0 0
        %967 = vmatpush1.bf16.msra.mxu0 0
        %968 = vmatprep.subr.bf16.mxu0 0
        %969 = vmatpush1.bf16.msra.mxu0 0
        %970 = vmatprep.mubr.bf16.mxu0 %v854
        %971 = vmatmul.mubr.bf16.gmra.mrb[0].mxu0 %v644
        %v972 = vpop.f32.mrb[0].mxu0
        %v973 = vadd.f32 0.0, %v972
        %v974 = vpop.f32.mrb[0].mxu0
        %v975 = vpop.f32.mrb[0].mxu0
        %v976 = vadd.f32 0.0, %v975
        %v977 = vpop.f32.mrb[0].mxu0
        %978 = vmatprep.mubr.bf16.mxu0 %v857
        %979 = vmatmul.mubr.bf16.gmra.mrb[0].mxu0 %v646
        %v980 = vpop.f32.mrb[0].mxu0
        %v981 = vadd.f32 0.0, %v980
        %v982 = vpop.f32.mrb[0].mxu0
        %v983 = vpop.f32.mrb[0].mxu0
        %v984 = vadd.f32 0.0, %v983
        %v985 = vpop.f32.mrb[0].mxu0
        %986 = vmatprep.mubr.bf16.mxu0 %v860
        %987 = vmatmul.mubr.bf16.gmra.mrb[0].mxu0 %v648
        %v988 = vpop.f32.mrb[0].mxu0
        %v989 = vadd.f32 0.0, %v988
        %v990 = vpop.f32.mrb[0].mxu0
        %v991 = vpop.f32.mrb[0].mxu0
        %v992 = vadd.f32 0.0, %v991
        %v993 = vpop.f32.mrb[0].mxu0
        %994 = vmatprep.mubr.bf16.mxu0 %v863
        %995 = vmatmul.mubr.bf16.gmra.mrb[0].mxu0 %v650
        %v996 = vpop.f32.mrb[0].mxu0
        %v997 = vadd.f32 0.0, %v996
        %v998 = vpop.f32.mrb[0].mxu0
        %v999 = vpop.f32.mrb[0].mxu0
        %v1000 = vadd.f32 0.0, %v999
        %v1001 = vpop.f32.mrb[0].mxu0
        %1002 = vdwg.mxu0
        %v1003 = vld [vmem:[%s5] sm:$0x7]
        %v1005 = vlaneseq
        %v1006 = vshrl.u32 %v1005, 7
        %v1007 = vsub.s32 0, %v1006
        %v1008 = vrot.slane %v1003, %v1007
        %v1009 = vlaneseq
        %v1010 = vshrl.u32 %v1009, 7
        %v1011 = vsub.s32 1, %v1010
        %v1012 = vrot.slane %v1003, %v1011
        %v1013 = vlaneseq
        %v1014 = vshrl.u32 %v1013, 7
        %v1015 = vsub.s32 2, %v1014
        %v1016 = vrot.slane %v1003, %v1015
        %v1020 = vmul.f32 %v900, %v1008
        %v1021 = vmul.f32 %v902, %v1012
        %v1022 = vmul.f32 %v973, %v1016
        %v1023 = vmul.f32 %v904, %v1008
        %v1024 = vmul.f32 %v906, %v1012
        %v1025 = vmul.f32 %v976, %v1016
        %v1026 = vmul.f32 %v910, %v1008
        %v1027 = vmul.f32 %v912, %v1012
        %v1028 = vmul.f32 %v981, %v1016
        %v1029 = vmul.f32 %v914, %v1008
        %v1030 = vmul.f32 %v916, %v1012
        %v1031 = vmul.f32 %v984, %v1016
        %v1032 = vmul.f32 %v920, %v1008
        %v1033 = vmul.f32 %v922, %v1012
        %v1034 = vmul.f32 %v989, %v1016
        %v1035 = vmul.f32 %v924, %v1008
        %v1036 = vmul.f32 %v926, %v1012
        %v1037 = vmul.f32 %v992, %v1016
        %v1038 = vmul.f32 %v930, %v1008
        %v1039 = vmul.f32 %v932, %v1012
        %v1040 = vmul.f32 %v997, %v1016
        %v1041 = vmul.f32 %v934, %v1008
        %v1042 = vmul.f32 %v936, %v1012
        %v1043 = vmul.f32 %v1000, %v1016
        %v1044 = vld [vmem:[%s6] sm:$0x7]
        %v1046 = vlaneseq
        %v1047 = vshrl.u32 %v1046, 7
        %v1048 = vsub.s32 0, %v1047
        %v1049 = vrot.slane %v1044, %v1048
        %v1050 = vlaneseq
        %v1051 = vshrl.u32 %v1050, 7
        %v1052 = vsub.s32 1, %v1051
        %v1053 = vrot.slane %v1044, %v1052
        %v1054 = vlaneseq
        %v1055 = vshrl.u32 %v1054, 7
        %v1056 = vsub.s32 2, %v1055
        %v1057 = vrot.slane %v1044, %v1056
        %v1061 = vadd.f32 %v1020, %v1049
        %v1062 = vadd.f32 %v1021, %v1053
        %v1063 = vadd.f32 %v1022, %v1057
        %v1064 = vadd.f32 %v1023, %v1049
        %v1065 = vadd.f32 %v1024, %v1053
        %v1066 = vadd.f32 %v1025, %v1057
        %v1067 = vadd.f32 %v1026, %v1049
        %v1068 = vadd.f32 %v1027, %v1053
        %v1069 = vadd.f32 %v1028, %v1057
        %v1070 = vadd.f32 %v1029, %v1049
        %v1071 = vadd.f32 %v1030, %v1053
        %v1072 = vadd.f32 %v1031, %v1057
        %v1073 = vadd.f32 %v1032, %v1049
        %v1074 = vadd.f32 %v1033, %v1053
        %v1075 = vadd.f32 %v1034, %v1057
        %v1076 = vadd.f32 %v1035, %v1049
        %v1077 = vadd.f32 %v1036, %v1053
        %v1078 = vadd.f32 %v1037, %v1057
        %v1079 = vadd.f32 %v1038, %v1049
        %v1080 = vadd.f32 %v1039, %v1053
        %v1081 = vadd.f32 %v1040, %v1057
        %v1082 = vadd.f32 %v1041, %v1049
        %v1083 = vadd.f32 %v1042, %v1053
        %v1084 = vadd.f32 %v1043, %v1057
        %v1085 = vxor.u32 %v1061, 2147483648
        %v1086 = vxor.u32 %v1062, 2147483648
        %v1087 = vxor.u32 %v1063, 2147483648
        %v1088 = vxor.u32 %v1064, 2147483648
        %v1089 = vxor.u32 %v1065, 2147483648
        %v1090 = vxor.u32 %v1066, 2147483648
        %v1091 = vxor.u32 %v1067, 2147483648
        %v1092 = vxor.u32 %v1068, 2147483648
        %v1093 = vxor.u32 %v1069, 2147483648
        %v1094 = vxor.u32 %v1070, 2147483648
        %v1095 = vxor.u32 %v1071, 2147483648
        %v1096 = vxor.u32 %v1072, 2147483648
        %v1097 = vxor.u32 %v1073, 2147483648
        %v1098 = vxor.u32 %v1074, 2147483648
        %v1099 = vxor.u32 %v1075, 2147483648
        %v1100 = vxor.u32 %v1076, 2147483648
        %v1101 = vxor.u32 %v1077, 2147483648
        %v1102 = vxor.u32 %v1078, 2147483648
        %v1103 = vxor.u32 %v1079, 2147483648
        %v1104 = vxor.u32 %v1080, 2147483648
        %v1105 = vxor.u32 %v1081, 2147483648
        %v1106 = vxor.u32 %v1082, 2147483648
        %v1107 = vxor.u32 %v1083, 2147483648
        %v1108 = vxor.u32 %v1084, 2147483648
        %v1109 = vmul.f32 %v1085, 1.442695
        %v1110 = vpow.pop %v1109
        %v1111 = vmul.f32 %v1086, 1.442695
        %v1112 = vpow.pop %v1111
        %v1113 = vmul.f32 %v1087, 1.442695
        %v1114 = vpow.pop %v1113
        %v1115 = vmul.f32 %v1088, 1.442695
        %v1116 = vpow.pop %v1115
        %v1117 = vmul.f32 %v1089, 1.442695
        %v1118 = vpow.pop %v1117
        %v1119 = vmul.f32 %v1090, 1.442695
        %v1120 = vpow.pop %v1119
        %v1121 = vmul.f32 %v1091, 1.442695
        %v1122 = vpow.pop %v1121
        %v1123 = vmul.f32 %v1092, 1.442695
        %v1124 = vpow.pop %v1123
        %v1125 = vmul.f32 %v1093, 1.442695
        %v1126 = vpow.pop %v1125
        %v1127 = vmul.f32 %v1094, 1.442695
        %v1128 = vpow.pop %v1127
        %v1129 = vmul.f32 %v1095, 1.442695
        %v1130 = vpow.pop %v1129
        %v1131 = vmul.f32 %v1096, 1.442695
        %v1132 = vpow.pop %v1131
        %v1133 = vmul.f32 %v1097, 1.442695
        %v1134 = vpow.pop %v1133
        %v1135 = vmul.f32 %v1098, 1.442695
        %v1136 = vpow.pop %v1135
        %v1137 = vmul.f32 %v1099, 1.442695
        %v1138 = vpow.pop %v1137
        %v1139 = vmul.f32 %v1100, 1.442695
        %v1140 = vpow.pop %v1139
        %v1141 = vmul.f32 %v1101, 1.442695
        %v1142 = vpow.pop %v1141
        %v1143 = vmul.f32 %v1102, 1.442695
        %v1144 = vpow.pop %v1143
        %v1145 = vmul.f32 %v1103, 1.442695
        %v1146 = vpow.pop %v1145
        %v1147 = vmul.f32 %v1104, 1.442695
        %v1148 = vpow.pop %v1147
        %v1149 = vmul.f32 %v1105, 1.442695
        %v1150 = vpow.pop %v1149
        %v1151 = vmul.f32 %v1106, 1.442695
        %v1152 = vpow.pop %v1151
        %v1153 = vmul.f32 %v1107, 1.442695
        %v1154 = vpow.pop %v1153
        %v1155 = vmul.f32 %v1108, 1.442695
        %v1156 = vpow.pop %v1155
        %v1157 = vadd.f32 %v1110, 1.0
        %v1158 = vadd.f32 %v1112, 1.0
        %v1159 = vadd.f32 %v1114, 1.0
        %v1160 = vadd.f32 %v1116, 1.0
        %v1161 = vadd.f32 %v1118, 1.0
        %v1162 = vadd.f32 %v1120, 1.0
        %v1163 = vadd.f32 %v1122, 1.0
        %v1164 = vadd.f32 %v1124, 1.0
        %v1165 = vadd.f32 %v1126, 1.0
        %v1166 = vadd.f32 %v1128, 1.0
        %v1167 = vadd.f32 %v1130, 1.0
        %v1168 = vadd.f32 %v1132, 1.0
        %v1169 = vadd.f32 %v1134, 1.0
        %v1170 = vadd.f32 %v1136, 1.0
        %v1171 = vadd.f32 %v1138, 1.0
        %v1172 = vadd.f32 %v1140, 1.0
        %v1173 = vadd.f32 %v1142, 1.0
        %v1174 = vadd.f32 %v1144, 1.0
        %v1175 = vadd.f32 %v1146, 1.0
        %v1176 = vadd.f32 %v1148, 1.0
        %v1177 = vadd.f32 %v1150, 1.0
        %v1178 = vadd.f32 %v1152, 1.0
        %v1179 = vadd.f32 %v1154, 1.0
        %v1180 = vadd.f32 %v1156, 1.0
        %v1181 = vrcp.pop %v1157
        %v1182 = vmul.f32 1.0, %v1181
        %v1183 = vrcp.pop %v1158
        %v1184 = vmul.f32 1.0, %v1183
        %v1185 = vrcp.pop %v1159
        %v1186 = vmul.f32 1.0, %v1185
        %v1187 = vrcp.pop %v1160
        %v1188 = vmul.f32 1.0, %v1187
        %v1189 = vrcp.pop %v1161
        %v1190 = vmul.f32 1.0, %v1189
        %v1191 = vrcp.pop %v1162
        %v1192 = vmul.f32 1.0, %v1191
        %v1193 = vrcp.pop %v1163
        %v1194 = vmul.f32 1.0, %v1193
        %v1195 = vrcp.pop %v1164
        %v1196 = vmul.f32 1.0, %v1195
        %v1197 = vrcp.pop %v1165
        %v1198 = vmul.f32 1.0, %v1197
        %v1199 = vrcp.pop %v1166
        %v1200 = vmul.f32 1.0, %v1199
        %v1201 = vrcp.pop %v1167
        %v1202 = vmul.f32 1.0, %v1201
        %v1203 = vrcp.pop %v1168
        %v1204 = vmul.f32 1.0, %v1203
        %v1205 = vrcp.pop %v1169
        %v1206 = vmul.f32 1.0, %v1205
        %v1207 = vrcp.pop %v1170
        %v1208 = vmul.f32 1.0, %v1207
        %v1209 = vrcp.pop %v1171
        %v1210 = vmul.f32 1.0, %v1209
        %v1211 = vrcp.pop %v1172
        %v1212 = vmul.f32 1.0, %v1211
        %v1213 = vrcp.pop %v1173
        %v1214 = vmul.f32 1.0, %v1213
        %v1215 = vrcp.pop %v1174
        %v1216 = vmul.f32 1.0, %v1215
        %v1217 = vrcp.pop %v1175
        %v1218 = vmul.f32 1.0, %v1217
        %v1219 = vrcp.pop %v1176
        %v1220 = vmul.f32 1.0, %v1219
        %v1221 = vrcp.pop %v1177
        %v1222 = vmul.f32 1.0, %v1221
        %v1223 = vrcp.pop %v1178
        %v1224 = vmul.f32 1.0, %v1223
        %v1225 = vrcp.pop %v1179
        %v1226 = vmul.f32 1.0, %v1225
        %v1227 = vrcp.pop %v1180
        %v1228 = vmul.f32 1.0, %v1227
        %v1229 = vmul.f32 %v1061, %v1182
        %v1230 = vmul.f32 %v1062, %v1184
        %v1231 = vmul.f32 %v1063, %v1186
        %v1232 = vmul.f32 %v1064, %v1188
        %v1233 = vmul.f32 %v1065, %v1190
        %v1234 = vmul.f32 %v1066, %v1192
        %v1235 = vmul.f32 %v1067, %v1194
        %v1236 = vmul.f32 %v1068, %v1196
        %v1237 = vmul.f32 %v1069, %v1198
        %v1238 = vmul.f32 %v1070, %v1200
        %v1239 = vmul.f32 %v1071, %v1202
        %v1240 = vmul.f32 %v1072, %v1204
        %v1241 = vmul.f32 %v1073, %v1206
        %v1242 = vmul.f32 %v1074, %v1208
        %v1243 = vmul.f32 %v1075, %v1210
        %v1244 = vmul.f32 %v1076, %v1212
        %v1245 = vmul.f32 %v1077, %v1214
        %v1246 = vmul.f32 %v1078, %v1216
        %v1247 = vmul.f32 %v1079, %v1218
        %v1248 = vmul.f32 %v1080, %v1220
        %v1249 = vmul.f32 %v1081, %v1222
        %v1250 = vmul.f32 %v1082, %v1224
        %v1251 = vmul.f32 %v1083, %v1226
        %v1252 = vmul.f32 %v1084, %v1228
        %v1253 = vld [vmem:[#allocation2] sm:$0x7]
        %v1254 = vadd.f32 %v1229, %v1232
        %v1255 = vadd.f32 %v1254, %v1235
        %v1256 = vadd.f32 %v1255, %v1238
        %v1257 = vadd.f32 %v1256, %v1241
        %v1258 = vadd.f32 %v1257, %v1244
        %v1259 = vadd.f32 %v1258, %v1247
        %v1260 = vadd.f32 %v1259, %v1250
        %v1261 = vrot.slane %v1260, 4
        %v1262 = vadd.f32 %v1260, %v1261
        %v1263 = vrot.slane %v1262, 2
        %v1264 = vadd.f32 %v1262, %v1263
        %v1265 = vrot.slane %v1264, 1
        %v1266 = vadd.f32 %v1264, %v1265
        %v1267 = vadd.f32 %v1230, %v1233
        %v1268 = vadd.f32 %v1267, %v1236
        %v1269 = vadd.f32 %v1268, %v1239
        %v1270 = vadd.f32 %v1269, %v1242
        %v1271 = vadd.f32 %v1270, %v1245
        %v1272 = vadd.f32 %v1271, %v1248
        %v1273 = vadd.f32 %v1272, %v1251
        %v1274 = vrot.slane %v1273, 4
        %v1275 = vadd.f32 %v1273, %v1274
        %v1276 = vrot.slane %v1275, 2
        %v1277 = vadd.f32 %v1275, %v1276
        %v1278 = vrot.slane %v1277, 1
        %v1279 = vadd.f32 %v1277, %v1278
        %vm1280 = vcmask 523264
        %v1281 = vsel %vm1280, %v1231, 0.0
        %v1282 = vsel %vm1280, %v1234, 0.0
        %v1283 = vadd.f32 %v1281, %v1282
        %v1284 = vsel %vm1280, %v1237, 0.0
        %v1285 = vadd.f32 %v1283, %v1284
        %v1286 = vsel %vm1280, %v1240, 0.0
        %v1287 = vadd.f32 %v1285, %v1286
        %v1288 = vsel %vm1280, %v1243, 0.0
        %v1289 = vadd.f32 %v1287, %v1288
        %v1290 = vsel %vm1280, %v1246, 0.0
        %v1291 = vadd.f32 %v1289, %v1290
        %v1292 = vsel %vm1280, %v1249, 0.0
        %v1293 = vadd.f32 %v1291, %v1292
        %v1294 = vsel %vm1280, %v1252, 0.0
        %v1295 = vadd.f32 %v1293, %v1294
        %v1296 = vrot.slane %v1295, 4
        %v1297 = vadd.f32 %v1295, %v1296
        %v1298 = vrot.slane %v1297, 2
        %v1299 = vadd.f32 %v1297, %v1298
        %v1300 = vrot.slane %v1299, 1
        %v1301 = vadd.f32 %v1299, %v1300
        %v1305 = vcombine.low %v1266, %v1279
        %v1307 = vunpack.c.l.s4 1966171168
        %v1308 = vunpack.c.0.s8 %v1307
        %v1309 = vlaneseq
        %v1310 = vshrl.u32 %v1309, 7
        %v1311 = vsub.s32 %v1308, %v1310
        %v1312 = vrot.slane %v1305, %v1311
        %v1314 = vunpack.c.l.s4 1966171168
        %v1315 = vunpack.c.0.s8 %v1314
        %v1316 = vlaneseq
        %v1317 = vshrl.u32 %v1316, 7
        %v1318 = vsub.s32 %v1315, %v1317
        %v1319 = vrot.slane %v1301, %v1318
        %v1320 = vcombine.low %v1312, %v1319
        %v1322 = vunpack.c.l.s4 1966171168
        %v1323 = vunpack.c.0.s8 %v1322
        %v1324 = vlaneseq
        %v1325 = vshrl.u32 %v1324, 7
        %v1326 = vsub.s32 %v1323, %v1325
        %v1327 = vrot.slane %v1320, %v1326
        %v1329 = vadd.f32 %v1253, %v1327
        %v1330 = vlaneseq
        %vm1331 = vcmp.ge.s32.totalorder %v1330, 0
        %vm1332 = vcmp.lt.s32.totalorder %v1330, 320
        %vm1333 = vmand %vm1331, %vm1332
        %1334 = vst.msk [vmem:[#allocation2] sm:$0x7] %vm1333, %v1329
        // Predicated region
        $region57: #{tpu_custom_call.1} parent=47 // pred_check
          %p1335 = pneg %p321
        $region58: #{tpu_custom_call.1} parent=47 // pred_check_branch
          %1337 = sbr.rel (%p1335) target = $region60
        $region59: #{tpu_custom_call.1} parent=47 // pred_region
          %v1338 = vld [vmem:[#allocation2] sm:$0x7]
          %v1339 = vmul.f32 %v1338, 0.015625
          %1340 = vst.msk [vmem:[%s309] sm:$0x7] %vm1333, %v1339
        $region60: #{tpu_custom_call.1} parent=47 // pred_fallthru
          _
        %s1341 = sand.u32 %s196, 1
        %s1342 = scalar_lea.sflag [#allocation5], %s1341
        %s1343 = sand.u32 %s196, 1
        %s1344 = smul.addr %s1343, 3
        %s1345 = scalar_lea.vmem [#allocation6], %s1344
        // Predicated region
        $region61: #{tpu_custom_call.1} parent=47 // pred_check
          %p1346 = pneg %p206
        $region62: #{tpu_custom_call.1} parent=47 // pred_check_branch
          %1348 = sbr.rel (%p1346) target = $region64
        $region63: #{tpu_custom_call.1} parent=47 // pred_region
          %s1350 = ssub.s32 48, 48
          %1351 = vsyncadd %s1342, %s1350
          %s1352 = smul.addr %s26, 3
          %s1353 = smul.addr %s1352, 16
          %s1354 = scalar_lea.hbm %s7, %s1353
          %s1356 = sshll.u32 %s1345, 4
          %s1357 = int_to_ptr.vmem [resolvable:$true] %s1356
          %1359 = dma.vmem_to_hbm [thread:$0]  %s1357, 48, %s1354, %s1342
        $region64: #{tpu_custom_call.1} parent=47 // pred_fallthru
          _
      $region48: #{tpu_custom_call.1} parent=5 // pred_fallthru
        _
      %p1360 = scmp.le.s32.totalorder 2, %s17
      // Predicated region
      $region65: #{tpu_custom_call.1} parent=5 // pred_check
        %p1361 = pneg %p1360
      $region66: #{tpu_custom_call.1} parent=5 // pred_check_branch
        %1363 = sbr.rel (%p1361) target = $region68
      $region67: #{tpu_custom_call.1} parent=5 // pred_region
        %s1364 = ssub.s32 %s17, 2
        // Predicated region
        $region69: #{tpu_custom_call.1} parent=67 // pred_check
          %p1365 = pneg %p212
        $region70: #{tpu_custom_call.1} parent=67 // pred_check_branch
          %1367 = sbr.rel (%p1365) target = $region72
        $region71: #{tpu_custom_call.1} parent=67 // pred_region
          %s1368 = sand.u32 %s197, 1
          %s1369 = scalar_lea.sflag [#allocation5], %s1368
          %s1370 = sand.u32 %s197, 1
          %s1371 = smul.addr %s1370, 3
          %s1372 = scalar_lea.vmem [#allocation6], %s1371
          %1373 = dma.done %s1369, 48
        $region72: #{tpu_custom_call.1} parent=67 // pred_fallthru
          _
      $region68: #{tpu_custom_call.1} parent=5 // pred_fallthru
        _
    $region6: #{tpu_custom_call.1} parent=1 // loop_footer
      %s21 = sadd.s32 1, %s17
    $region7: #{tpu_custom_call.1} parent=1 // loop_footer_branch
      %16 = sbr.rel target = $region3
    $region8: #{tpu_custom_call.1} parent=1 // loop_exit
      _
    %1374 = vsyncpa [#allocation4], 1
    %s1375 = scalar_lea.sflag [#allocation4], 1
    %1376 = vsyncpa %s1375, 1
    %1377 = vsyncpa [#allocation5], 1
    %s1378 = scalar_lea.sflag [#allocation5], 1
    %1379 = vsyncpa %s1378, 1

</llo_original>
